<compile_context>
chip_gen: v7x
topology: tpu7x:2x2x1
jax: 0.10.0
libtpu: 0.0.40
codegen_flags: <defaults>
</compile_context>

<pallas_src>
import jax
import jax.numpy as jnp
from jax.experimental import pallas as pl
from jax.experimental.pallas import tpu as pltpu

_LANES = 128                    # vreg lane width -> lane-dense, unmasked stores
_ROW_ALIGN = 32                 # rows % 32 == 0 keeps f32/bf16/int8 sublane packing legal
_BLOCK_BYTES = 4 * 1024 * 1024  # ~4 MiB per block (dtype-independent byte budget)
_VMEM_LIMIT = 32 * 1024 * 1024  # 2x in + 2x out buffers (16 MiB) + headroom; explicit
                                # so v5e's 16 MiB scoped-VMEM default is not a limit
_TINY_ELEMS = 32 * 1024         # below ~128 KiB a fused XLA add beats a Pallas launch


def _add_one_kernel(x_ref, o_ref):
    # Elementwise hot path in native dtype: o = x + 1
    o_ref[...] = x_ref[...] + jnp.asarray(1, dtype=o_ref.dtype)


def _pick_block_rows(rows: int, itemsize: int) -> int:
    """Byte-budgeted block rows (multiple of 32); force >=2 grid steps when possible."""
    budget_rows = max(
        _ROW_ALIGN,
        (_BLOCK_BYTES // (_LANES * itemsize)) // _ROW_ALIGN * _ROW_ALIGN,
    )
    if rows > budget_rows:
        return budget_rows
    # Whole array fits in one block: split into two grid steps so the
    # "parallel" grid axis can shard across both v7x TensorCores.
    if rows >= 4 * _ROW_ALIGN:
        half = -(-rows // 2)                           # ceil(rows / 2)
        return -(-half // _ROW_ALIGN) * _ROW_ALIGN     # round up to 32 rows
    return rows                                        # full-extent block (always legal)


def _add_one_slab(slab: jax.Array) -> jax.Array:
    """Run the +1 kernel over a lane-dense (rows, 128) slab in its native dtype."""
    rows, lanes = slab.shape
    block_rows = _pick_block_rows(rows, slab.dtype.itemsize)
    grid = (pl.cdiv(rows, block_rows),)
    return pl.pallas_call(
        _add_one_kernel,
        out_shape=jax.ShapeDtypeStruct((rows, lanes), slab.dtype),
        grid_spec=pltpu.PrefetchScalarGridSpec(
            num_scalar_prefetch=0,
            grid=grid,
            in_specs=[pl.BlockSpec((block_rows, lanes), lambda i: (i, 0))],
            out_specs=pl.BlockSpec((block_rows, lanes), lambda i: (i, 0)),
        ),
        # No input_output_aliases: without guaranteed donation XLA would insert
        # a defensive full-array copy before the call.
        compiler_params=pltpu.CompilerParams(
            dimension_semantics=("parallel",),
            vmem_limit_bytes=_VMEM_LIMIT,
        ),
    )(slab)


def pony_forward(x: jax.Array) -> jax.Array:
    """Equivalent of Pony().forward(x): returns x + 1 with same shape/dtype."""
    shape = x.shape
    dtype = x.dtype
    n = x.size
    one = jnp.asarray(1, dtype)

    # Tiny inputs (incl. the scalar from the PyTorch spec) and element counts
    # that are not 128-aligned: a single fused XLA add is one read + one write,
    # which beats a Pallas launch or any prefix/tail stitching.
    if n < _TINY_ELEMS or n % _LANES != 0:
        return x + one

    # Metadata-only reshape to a lane-dense (rows, 128) slab.
    slab = x.reshape(n // _LANES, _LANES)
    return _add_one_slab(slab).reshape(shape)


if __name__ == "__main__":
    key = jax.random.PRNGKey(0)

    # 1) Kernel path: 1 MiB f32 slab -> 2 lane-dense blocks (parallel grid).
    x = jax.random.normal(key, (512, 512), jnp.float32)
    out = pony_forward(x)
    jax.block_until_ready(out)
    assert out.shape == x.shape and out.dtype == x.dtype
    assert jnp.allclose(out, x + 1.0, atol=1e-6)

    # 2) Small 4-D tensor (tiny fast path, fused XLA add).
    xs4 = jax.random.normal(jax.random.PRNGKey(1), (2, 4, 16, 16), jnp.float32)
    outs4 = pony_forward(xs4)
    jax.block_until_ready(outs4)
    assert outs4.shape == xs4.shape and outs4.dtype == xs4.dtype
    assert jnp.allclose(outs4, xs4 + 1.0, atol=1e-6)

    # 3) Scalar case from the original PyTorch spec.
    xsc = jnp.asarray(1.0, jnp.float32)
    outsc = pony_forward(xsc)
    jax.block_until_ready(outsc)
    assert jnp.allclose(outsc, xsc + 1.0, atol=1e-6)

    # 4) Integer dtype on the kernel path stays exact (native-dtype compute).
    xi = (jnp.arange(512 * 128, dtype=jnp.int32) + (1 << 26)).reshape(512, 128)
    outi = pony_forward(xi)
    jax.block_until_ready(outi)
    assert outi.dtype == jnp.int32
    assert jnp.array_equal(outi, xi + 1)

    # 5) Uneven final block (rows % block_rows != 0): no aliasing, so the
    #    partial last block cannot be double-incremented.
    xu = jax.random.normal(jax.random.PRNGKey(2), (8200, 128), jnp.float32)
    outu = pony_forward(xu)
    jax.block_until_ready(outu)
    assert jnp.allclose(outu, xu + 1.0, atol=1e-6)

    # 6) Non-128-aligned element count -> whole-array fused XLA add.
    xr = jax.random.normal(jax.random.PRNGKey(3), (300, 301), jnp.float32)
    outr = pony_forward(xr)
    jax.block_until_ready(outr)
    assert jnp.allclose(outr, xr + 1.0, atol=1e-6)

    print("KERNEL_OK")
</pallas_src>

<mosaic_0001>
module attributes {stable_mosaic.version = 11 : i64} {
  func.func @_add_one_kernel(%arg0: i32, %arg1: memref<1024x128xf32, #tpu.memory_space<vmem>>, %arg2: memref<1024x128xf32, #tpu.memory_space<vmem>>) attributes {dimension_semantics = [#tpu.dimension_semantics<parallel>], iteration_bounds = array<i64: 2>, scalar_prefetch = 0 : i64, scratch_operands = 0 : i64, tpu.core_type = #tpu.core_type<tc>, window_params = [{transform_indices = @transform_0, window_bounds = array<i64: 1024, 128>}, {transform_indices = @transform_1, window_bounds = array<i64: 1024, 128>}]} {
    %c0 = arith.constant 0 : index
    %c0_0 = arith.constant 0 : index
    %0 = vector.load %arg1[%c0, %c0_0] : memref<1024x128xf32, #tpu.memory_space<vmem>>, vector<1024x128xf32>
    %cst = arith.constant 1.000000e+00 : f32
    %1 = vector.broadcast %cst : f32 to vector<1024x128xf32>
    %2 = arith.addf %0, %1 : vector<1024x128xf32>
    %c0_1 = arith.constant 0 : index
    %c0_2 = arith.constant 0 : index
    %3 = vector.load %arg2[%c0_1, %c0_2] : memref<1024x128xf32, #tpu.memory_space<vmem>>, vector<1024x128xf32>
    tpu.vector_store %arg2[%c0_1, %c0_2], %2 {strides = array<i32>} : memref<1024x128xf32, #tpu.memory_space<vmem>>, vector<1024x128xf32>,
    return
  }
  func.func @transform_0(%arg0: i32) -> (i32, i32) {
    %c0_i32 = arith.constant 0 : i32
    %c0_i32_0 = arith.constant 0 : i32
    return %arg0, %c0_i32 : i32, i32
  }
  func.func @transform_1(%arg0: i32) -> (i32, i32) {
    %c0_i32 = arith.constant 0 : i32
    %c0_i32_0 = arith.constant 0 : i32
    return %arg0, %c0_i32 : i32, i32
  }
}

</mosaic_0001>

<llo_original>
// kernel: tpu_custom_call.1
$region0: #{tpu_custom_call.1}
  #allocation0 [shape = 'u32[]', space=smem, size = 0x4, offset = 0x4, fixed_abs, tag = 'smem constant byte address 0x4 - core index']
  #allocation1 [shape = 'u32[144,128]{1,0:T(1,128)}', space=vmem, size = 0x12000, scoped, tag = 'internal scratch']
  %s0 = inlined_call_operand.hbm [shape: f32[2048,128], index: 0, kind: input, shape index: {}]
  %s1 = inlined_call_operand.hbm [shape: f32[2048,128], index: 1, kind: output, shape index: {}]
  %s2 = sld [smem:[#allocation0]]
  $region41: #{tpu_custom_call.1} parent=0
    _
  %s4 = ssub.s32 1, %s2
  %s5 = scalar_select 0, %s4, %s2
  $region1: #{tpu_custom_call.1} parent=0
    #allocation2 [shape = 'u8[1048576]{0}', space=vmem, size = 0x100000, scoped, tag = 'input window, operand 0']
    #allocation3 [shape = 's32[2]{0}', space=sflag, size = 0x8, scoped, tag = 'scoped memory for tpu_custom_call.1']
    #allocation4 [shape = 's32[2]{0}', space=sflag, size = 0x8, scoped, tag = 'scoped memory for tpu_custom_call.1']
    #allocation5 [shape = 'u8[1048576]{0}', space=vmem, size = 0x100000, scoped, tag = 'output window, operand 0']
    %6 = vsyncpa [#allocation3], 0
    %s7 = scalar_lea.sflag [#allocation3], 1
    %8 = vsyncpa %s7, 0
    %9 = vsyncpa [#allocation4], 0
    %s10 = scalar_lea.sflag [#allocation4], 1
    %11 = vsyncpa %s10, 0
    loop: start=0, step=1, limit=4
    $region2: #{tpu_custom_call.1} parent=1 // loop_pre_header
      _
    $region3: #{tpu_custom_call.1} parent=1 // loop_header
      %s13 = sphi 0, %s17
      %p14 = scmp.ge.s32.totalorder %s13, 4
      %s23 = sphi 0, %s25
      %s26 = sphi 0, %s23
      %s27 = sphi 0, %s26
      %s43 = sphi 0, %s27
      %s49 = sphi 0, %s51
      %s52 = sphi 0, %s49
      %s53 = sphi 0, %s52
      %s69 = sphi 0, %s53
    $region4: #{tpu_custom_call.1} parent=1 // loop_header_branch
      %16 = sbr.rel (%p14) target = $region8
    $region5: #{tpu_custom_call.1} parent=1 // loop_body
      %s18 = ssub.s32 %s13, 1
      %s19 = ssub.s32 %s13, 2
      %s20 = sadd.s32 %s13, 1
      %s21 = ssub.s32 %s13, %s20
      %p22 = scmp.eq.s32.totalorder %s21, 0
      %s24 = sadd.s32 %s23, 1
      %s25 = scalar_select %p22, %s23, %s24
      %p28 = pneg %p22
      %p29 = scmp.eq.s32.totalorder %s13, 1
      %p30 = por %p28, %p29
      %p31 = scmp.ne.s32.totalorder %s23, %s26
      %p32 = scmp.eq.s32.totalorder %s13, 0
      %p33 = por %p31, %p32
      %p34 = scmp.ne.s32.totalorder %s23, %s26
      %p35 = scmp.eq.s32.totalorder %s18, 1
      %p36 = por %p34, %p35
      %p37 = scmp.ne.s32.totalorder %s26, %s27
      %p38 = scmp.eq.s32.totalorder %s18, 0
      %p39 = por %p37, %p38
      %p40 = scmp.ne.s32.totalorder %s26, %s27
      %p41 = scmp.eq.s32.totalorder %s19, 1
      %p42 = por %p40, %p41
      %p44 = scmp.ne.s32.totalorder %s27, %s43
      %p45 = scmp.eq.s32.totalorder %s19, 0
      %p46 = por %p44, %p45
      %s47 = ssub.s32 %s13, %s20
      %p48 = scmp.eq.s32.totalorder %s47, 0
      %s50 = sadd.s32 %s49, 1
      %s51 = scalar_select %p48, %s49, %s50
      %p54 = pneg %p48
      %p55 = scmp.eq.s32.totalorder %s13, 1
      %p56 = por %p54, %p55
      %p57 = scmp.ne.s32.totalorder %s49, %s52
      %p58 = scmp.eq.s32.totalorder %s13, 0
      %p59 = por %p57, %p58
      %p60 = scmp.ne.s32.totalorder %s49, %s52
      %p61 = scmp.eq.s32.totalorder %s18, 1
      %p62 = por %p60, %p61
      %p63 = scmp.ne.s32.totalorder %s52, %s53
      %p64 = scmp.eq.s32.totalorder %s18, 0
      %p65 = por %p63, %p64
      %p66 = scmp.ne.s32.totalorder %s52, %s53
      %p67 = scmp.eq.s32.totalorder %s19, 1
      %p68 = por %p66, %p67
      %p70 = scmp.ne.s32.totalorder %s53, %s69
      %p71 = scmp.eq.s32.totalorder %s19, 0
      %p72 = por %p70, %p71
      %p73 = scmp.le.s32.totalorder 1, %s13
      %p74 = scmp.lt.s32.totalorder %s13, 3
      %p75 = pnand %p73, %p74
      %p76 = pneg %p75
      // Predicated region
      $region9: #{tpu_custom_call.1} parent=5 // pred_check
        _
      $region10: #{tpu_custom_call.1} parent=5 // pred_check_branch
        %78 = sbr.rel (%p75) target = $region12
      $region11: #{tpu_custom_call.1} parent=5 // pred_region
        %s79 = ssub.s32 %s13, 1
      $region12: #{tpu_custom_call.1} parent=5 // pred_fallthru
        _
      %p80 = scmp.lt.s32.totalorder %s13, 2
      // Predicated region
      $region13: #{tpu_custom_call.1} parent=5 // pred_check
        %p81 = pneg %p80
      $region14: #{tpu_custom_call.1} parent=5 // pred_check_branch
        %83 = sbr.rel (%p81) target = $region16
      $region15: #{tpu_custom_call.1} parent=5 // pred_region
        // Predicated region
        $region17: #{tpu_custom_call.1} parent=15 // pred_check
          %p84 = pneg %p33
        $region18: #{tpu_custom_call.1} parent=15 // pred_check_branch
          %86 = sbr.rel (%p84) target = $region20
        $region19: #{tpu_custom_call.1} parent=15 // pred_region
          %s87 = sand.u32 %s23, 1
          %s88 = scalar_lea.sflag [#allocation3], %s87
          %s89 = sand.u32 %s23, 1
          %s90 = smul.addr %s89, 1024
          %s91 = scalar_lea.vmem [#allocation2], %s90
          %s92 = smul.u32 128, %s13
          %s94 = ssub.s32 16384, 16384
          %95 = vsyncadd %s88, %s94
          %s96 = smul.addr %s92, 128
          %s97 = scalar_lea.hbm %s0, %s96
          %s98 = sshll.u32 %s91, 4
          %s99 = int_to_ptr.vmem [resolvable:$true] %s98
          %104 = dma.hbm_to_vmem [thread:$0]  %s97, 16384, %s99, %s88, 128, 128, 8
        $region20: #{tpu_custom_call.1} parent=15 // pred_fallthru
          _
      $region16: #{tpu_custom_call.1} parent=5 // pred_fallthru
        _
      %p105 = scmp.le.s32.totalorder 1, %s13
      %p106 = scmp.lt.s32.totalorder %s13, 3
      %p107 = pnand %p105, %p106
      %p108 = pneg %p107
      // Predicated region
      $region21: #{tpu_custom_call.1} parent=5 // pred_check
        _
      $region22: #{tpu_custom_call.1} parent=5 // pred_check_branch
        %110 = sbr.rel (%p107) target = $region24
      $region23: #{tpu_custom_call.1} parent=5 // pred_region
        %s111 = ssub.s32 %s13, 1
        %s112 = sand.u32 %s26, 1
        %s113 = scalar_lea.sflag [#allocation3], %s112
        %s114 = sand.u32 %s26, 1
        %s115 = smul.addr %s114, 1024
        %s116 = scalar_lea.vmem [#allocation2], %s115
        // Predicated region
        $region25: #{tpu_custom_call.1} parent=23 // pred_check
          %p117 = pneg %p39
        $region26: #{tpu_custom_call.1} parent=23 // pred_check_branch
          %119 = sbr.rel (%p117) target = $region28
        $region27: #{tpu_custom_call.1} parent=23 // pred_region
          %120 = dma.done %s113, 16384
        $region28: #{tpu_custom_call.1} parent=23 // pred_fallthru
          _
        %s121 = sand.u32 %s26, 1
        %s122 = scalar_lea.sflag [#allocation3], %s121
        %s123 = sand.u32 %s26, 1
        %s124 = smul.addr %s123, 1024
        %s125 = scalar_lea.vmem [#allocation2], %s124
        %p126 = pneg %p39
        %p127 = pneg %p36
        %p128 = pneg %p65
        %p129 = pneg %p62
        %s130 = sand.u32 %s52, 1
        %s131 = scalar_lea.sflag [#allocation4], %s130
        %s132 = sand.u32 %s52, 1
        %s133 = smul.addr %s132, 1024
        %s134 = scalar_lea.vmem [#allocation5], %s133
        %s135 = smul.u32 128, %s18
        %s136 = smul.u32 128, %s18
        %v137 = vld [vmem:[%s116] sm:$0xff]
        %v138 = vld [vmem:[%s116 + $0x8] sm:$0xff]
        %v139 = vld [vmem:[%s116 + $0x10] sm:$0xff]
        %v140 = vld [vmem:[%s116 + $0x18] sm:$0xff]
        %v141 = vld [vmem:[%s116 + $0x20] sm:$0xff]
        %v142 = vld [vmem:[%s116 + $0x28] sm:$0xff]
        %v143 = vld [vmem:[%s116 + $0x30] sm:$0xff]
        %v144 = vld [vmem:[%s116 + $0x38] sm:$0xff]
        %v145 = vld [vmem:[%s116 + $0x40] sm:$0xff]
        %v146 = vld [vmem:[%s116 + $0x48] sm:$0xff]
        %v147 = vld [vmem:[%s116 + $0x50] sm:$0xff]
        %v148 = vld [vmem:[%s116 + $0x58] sm:$0xff]
        %v149 = vld [vmem:[%s116 + $0x60] sm:$0xff]
        %v150 = vld [vmem:[%s116 + $0x68] sm:$0xff]
        %v151 = vld [vmem:[%s116 + $0x70] sm:$0xff]
        %v152 = vld [vmem:[%s116 + $0x78] sm:$0xff]
        %v153 = vld [vmem:[%s116 + $0x80] sm:$0xff]
        %v154 = vld [vmem:[%s116 + $0x88] sm:$0xff]
        %v155 = vld [vmem:[%s116 + $0x90] sm:$0xff]
        %v156 = vld [vmem:[%s116 + $0x98] sm:$0xff]
        %v157 = vld [vmem:[%s116 + $0xa0] sm:$0xff]
        %v158 = vld [vmem:[%s116 + $0xa8] sm:$0xff]
        %v159 = vld [vmem:[%s116 + $0xb0] sm:$0xff]
        %v160 = vld [vmem:[%s116 + $0xb8] sm:$0xff]
        %v161 = vld [vmem:[%s116 + $0xc0] sm:$0xff]
        %v162 = vld [vmem:[%s116 + $0xc8] sm:$0xff]
        %v163 = vld [vmem:[%s116 + $0xd0] sm:$0xff]
        %v164 = vld [vmem:[%s116 + $0xd8] sm:$0xff]
        %v165 = vld [vmem:[%s116 + $0xe0] sm:$0xff]
        %v166 = vld [vmem:[%s116 + $0xe8] sm:$0xff]
        %v167 = vld [vmem:[%s116 + $0xf0] sm:$0xff]
        %v168 = vld [vmem:[%s116 + $0xf8] sm:$0xff]
        %v169 = vld [vmem:[%s116 + $0x100] sm:$0xff]
        %v170 = vld [vmem:[%s116 + $0x108] sm:$0xff]
        %v171 = vld [vmem:[%s116 + $0x110] sm:$0xff]
        %v172 = vld [vmem:[%s116 + $0x118] sm:$0xff]
        %v173 = vld [vmem:[%s116 + $0x120] sm:$0xff]
        %v174 = vld [vmem:[%s116 + $0x128] sm:$0xff]
        %v175 = vld [vmem:[%s116 + $0x130] sm:$0xff]
        %v176 = vld [vmem:[%s116 + $0x138] sm:$0xff]
        %v177 = vld [vmem:[%s116 + $0x140] sm:$0xff]
        %v178 = vld [vmem:[%s116 + $0x148] sm:$0xff]
        %v179 = vld [vmem:[%s116 + $0x150] sm:$0xff]
        %v180 = vld [vmem:[%s116 + $0x158] sm:$0xff]
        %v181 = vld [vmem:[%s116 + $0x160] sm:$0xff]
        %v182 = vld [vmem:[%s116 + $0x168] sm:$0xff]
        %v183 = vld [vmem:[%s116 + $0x170] sm:$0xff]
        %v184 = vld [vmem:[%s116 + $0x178] sm:$0xff]
        %v185 = vld [vmem:[%s116 + $0x180] sm:$0xff]
        %v186 = vld [vmem:[%s116 + $0x188] sm:$0xff]
        %v187 = vld [vmem:[%s116 + $0x190] sm:$0xff]
        %v188 = vld [vmem:[%s116 + $0x198] sm:$0xff]
        %v189 = vld [vmem:[%s116 + $0x1a0] sm:$0xff]
        %v190 = vld [vmem:[%s116 + $0x1a8] sm:$0xff]
        %v191 = vld [vmem:[%s116 + $0x1b0] sm:$0xff]
        %v192 = vld [vmem:[%s116 + $0x1b8] sm:$0xff]
        %v193 = vld [vmem:[%s116 + $0x1c0] sm:$0xff]
        %v194 = vld [vmem:[%s116 + $0x1c8] sm:$0xff]
        %v195 = vld [vmem:[%s116 + $0x1d0] sm:$0xff]
        %v196 = vld [vmem:[%s116 + $0x1d8] sm:$0xff]
        %v197 = vld [vmem:[%s116 + $0x1e0] sm:$0xff]
        %v198 = vld [vmem:[%s116 + $0x1e8] sm:$0xff]
        %v199 = vld [vmem:[%s116 + $0x1f0] sm:$0xff]
        %v200 = vld [vmem:[%s116 + $0x1f8] sm:$0xff]
        %v201 = vld [vmem:[%s116 + $0x200] sm:$0xff]
        %v202 = vld [vmem:[%s116 + $0x208] sm:$0xff]
        %v203 = vld [vmem:[%s116 + $0x210] sm:$0xff]
        %v204 = vld [vmem:[%s116 + $0x218] sm:$0xff]
        %v205 = vld [vmem:[%s116 + $0x220] sm:$0xff]
        %v206 = vld [vmem:[%s116 + $0x228] sm:$0xff]
        %v207 = vld [vmem:[%s116 + $0x230] sm:$0xff]
        %v208 = vld [vmem:[%s116 + $0x238] sm:$0xff]
        %v209 = vld [vmem:[%s116 + $0x240] sm:$0xff]
        %v210 = vld [vmem:[%s116 + $0x248] sm:$0xff]
        %v211 = vld [vmem:[%s116 + $0x250] sm:$0xff]
        %v212 = vld [vmem:[%s116 + $0x258] sm:$0xff]
        %v213 = vld [vmem:[%s116 + $0x260] sm:$0xff]
        %v214 = vld [vmem:[%s116 + $0x268] sm:$0xff]
        %v215 = vld [vmem:[%s116 + $0x270] sm:$0xff]
        %v216 = vld [vmem:[%s116 + $0x278] sm:$0xff]
        %v217 = vld [vmem:[%s116 + $0x280] sm:$0xff]
        %v218 = vld [vmem:[%s116 + $0x288] sm:$0xff]
        %v219 = vld [vmem:[%s116 + $0x290] sm:$0xff]
        %v220 = vld [vmem:[%s116 + $0x298] sm:$0xff]
        %v221 = vld [vmem:[%s116 + $0x2a0] sm:$0xff]
        %v222 = vld [vmem:[%s116 + $0x2a8] sm:$0xff]
        %v223 = vld [vmem:[%s116 + $0x2b0] sm:$0xff]
        %v224 = vld [vmem:[%s116 + $0x2b8] sm:$0xff]
        %v225 = vld [vmem:[%s116 + $0x2c0] sm:$0xff]
        %v226 = vld [vmem:[%s116 + $0x2c8] sm:$0xff]
        %v227 = vld [vmem:[%s116 + $0x2d0] sm:$0xff]
        %v228 = vld [vmem:[%s116 + $0x2d8] sm:$0xff]
        %v229 = vld [vmem:[%s116 + $0x2e0] sm:$0xff]
        %v230 = vld [vmem:[%s116 + $0x2e8] sm:$0xff]
        %v231 = vld [vmem:[%s116 + $0x2f0] sm:$0xff]
        %v232 = vld [vmem:[%s116 + $0x2f8] sm:$0xff]
        %v233 = vld [vmem:[%s116 + $0x300] sm:$0xff]
        %v234 = vld [vmem:[%s116 + $0x308] sm:$0xff]
        %v235 = vld [vmem:[%s116 + $0x310] sm:$0xff]
        %v236 = vld [vmem:[%s116 + $0x318] sm:$0xff]
        %v237 = vld [vmem:[%s116 + $0x320] sm:$0xff]
        %v238 = vld [vmem:[%s116 + $0x328] sm:$0xff]
        %v239 = vld [vmem:[%s116 + $0x330] sm:$0xff]
        %v240 = vld [vmem:[%s116 + $0x338] sm:$0xff]
        %v241 = vld [vmem:[%s116 + $0x340] sm:$0xff]
        %v242 = vld [vmem:[%s116 + $0x348] sm:$0xff]
        %v243 = vld [vmem:[%s116 + $0x350] sm:$0xff]
        %v244 = vld [vmem:[%s116 + $0x358] sm:$0xff]
        %v245 = vld [vmem:[%s116 + $0x360] sm:$0xff]
        %v246 = vld [vmem:[%s116 + $0x368] sm:$0xff]
        %v247 = vld [vmem:[%s116 + $0x370] sm:$0xff]
        %v248 = vld [vmem:[%s116 + $0x378] sm:$0xff]
        %v249 = vld [vmem:[%s116 + $0x380] sm:$0xff]
        %v250 = vld [vmem:[%s116 + $0x388] sm:$0xff]
        %v251 = vld [vmem:[%s116 + $0x390] sm:$0xff]
        %v252 = vld [vmem:[%s116 + $0x398] sm:$0xff]
        %v253 = vld [vmem:[%s116 + $0x3a0] sm:$0xff]
        %v254 = vld [vmem:[%s116 + $0x3a8] sm:$0xff]
        %v255 = vld [vmem:[%s116 + $0x3b0] sm:$0xff]
        %v256 = vld [vmem:[%s116 + $0x3b8] sm:$0xff]
        %v257 = vld [vmem:[%s116 + $0x3c0] sm:$0xff]
        %v258 = vld [vmem:[%s116 + $0x3c8] sm:$0xff]
        %v259 = vld [vmem:[%s116 + $0x3d0] sm:$0xff]
        %v260 = vld [vmem:[%s116 + $0x3d8] sm:$0xff]
        %v261 = vld [vmem:[%s116 + $0x3e0] sm:$0xff]
        %v262 = vld [vmem:[%s116 + $0x3e8] sm:$0xff]
        %v263 = vld [vmem:[%s116 + $0x3f0] sm:$0xff]
        %v264 = vld [vmem:[%s116 + $0x3f8] sm:$0xff]
        %v265 = vadd.f32 %v137, 1.0
        %v266 = vadd.f32 %v138, 1.0
        %v267 = vadd.f32 %v139, 1.0
        %v268 = vadd.f32 %v140, 1.0
        %v269 = vadd.f32 %v141, 1.0
        %v270 = vadd.f32 %v142, 1.0
        %v271 = vadd.f32 %v143, 1.0
        %v272 = vadd.f32 %v144, 1.0
        %v273 = vadd.f32 %v145, 1.0
        %v274 = vadd.f32 %v146, 1.0
        %v275 = vadd.f32 %v147, 1.0
        %v276 = vadd.f32 %v148, 1.0
        %v277 = vadd.f32 %v149, 1.0
        %v278 = vadd.f32 %v150, 1.0
        %v279 = vadd.f32 %v151, 1.0
        %v280 = vadd.f32 %v152, 1.0
        %v281 = vadd.f32 %v153, 1.0
        %v282 = vadd.f32 %v154, 1.0
        %v283 = vadd.f32 %v155, 1.0
        %v284 = vadd.f32 %v156, 1.0
        %v285 = vadd.f32 %v157, 1.0
        %v286 = vadd.f32 %v158, 1.0
        %v287 = vadd.f32 %v159, 1.0
        %v288 = vadd.f32 %v160, 1.0
        %v289 = vadd.f32 %v161, 1.0
        %v290 = vadd.f32 %v162, 1.0
        %v291 = vadd.f32 %v163, 1.0
        %v292 = vadd.f32 %v164, 1.0
        %v293 = vadd.f32 %v165, 1.0
        %v294 = vadd.f32 %v166, 1.0
        %v295 = vadd.f32 %v167, 1.0
        %v296 = vadd.f32 %v168, 1.0
        %v297 = vadd.f32 %v169, 1.0
        %v298 = vadd.f32 %v170, 1.0
        %v299 = vadd.f32 %v171, 1.0
        %v300 = vadd.f32 %v172, 1.0
        %v301 = vadd.f32 %v173, 1.0
        %v302 = vadd.f32 %v174, 1.0
        %v303 = vadd.f32 %v175, 1.0
        %v304 = vadd.f32 %v176, 1.0
        %v305 = vadd.f32 %v177, 1.0
        %v306 = vadd.f32 %v178, 1.0
        %v307 = vadd.f32 %v179, 1.0
        %v308 = vadd.f32 %v180, 1.0
        %v309 = vadd.f32 %v181, 1.0
        %v310 = vadd.f32 %v182, 1.0
        %v311 = vadd.f32 %v183, 1.0
        %v312 = vadd.f32 %v184, 1.0
        %v313 = vadd.f32 %v185, 1.0
        %v314 = vadd.f32 %v186, 1.0
        %v315 = vadd.f32 %v187, 1.0
        %v316 = vadd.f32 %v188, 1.0
        %v317 = vadd.f32 %v189, 1.0
        %v318 = vadd.f32 %v190, 1.0
        %v319 = vadd.f32 %v191, 1.0
        %v320 = vadd.f32 %v192, 1.0
        %v321 = vadd.f32 %v193, 1.0
        %v322 = vadd.f32 %v194, 1.0
        %v323 = vadd.f32 %v195, 1.0
        %v324 = vadd.f32 %v196, 1.0
        %v325 = vadd.f32 %v197, 1.0
        %v326 = vadd.f32 %v198, 1.0
        %v327 = vadd.f32 %v199, 1.0
        %v328 = vadd.f32 %v200, 1.0
        %v329 = vadd.f32 %v201, 1.0
        %v330 = vadd.f32 %v202, 1.0
        %v331 = vadd.f32 %v203, 1.0
        %v332 = vadd.f32 %v204, 1.0
        %v333 = vadd.f32 %v205, 1.0
        %v334 = vadd.f32 %v206, 1.0
        %v335 = vadd.f32 %v207, 1.0
        %v336 = vadd.f32 %v208, 1.0
        %v337 = vadd.f32 %v209, 1.0
        %v338 = vadd.f32 %v210, 1.0
        %v339 = vadd.f32 %v211, 1.0
        %v340 = vadd.f32 %v212, 1.0
        %v341 = vadd.f32 %v213, 1.0
        %v342 = vadd.f32 %v214, 1.0
        %v343 = vadd.f32 %v215, 1.0
        %v344 = vadd.f32 %v216, 1.0
        %v345 = vadd.f32 %v217, 1.0
        %v346 = vadd.f32 %v218, 1.0
        %v347 = vadd.f32 %v219, 1.0
        %v348 = vadd.f32 %v220, 1.0
        %v349 = vadd.f32 %v221, 1.0
        %v350 = vadd.f32 %v222, 1.0
        %v351 = vadd.f32 %v223, 1.0
        %v352 = vadd.f32 %v224, 1.0
        %v353 = vadd.f32 %v225, 1.0
        %v354 = vadd.f32 %v226, 1.0
        %v355 = vadd.f32 %v227, 1.0
        %v356 = vadd.f32 %v228, 1.0
        %v357 = vadd.f32 %v229, 1.0
        %v358 = vadd.f32 %v230, 1.0
        %v359 = vadd.f32 %v231, 1.0
        %v360 = vadd.f32 %v232, 1.0
        %v361 = vadd.f32 %v233, 1.0
        %v362 = vadd.f32 %v234, 1.0
        %v363 = vadd.f32 %v235, 1.0
        %v364 = vadd.f32 %v236, 1.0
        %v365 = vadd.f32 %v237, 1.0
        %v366 = vadd.f32 %v238, 1.0
        %v367 = vadd.f32 %v239, 1.0
        %v368 = vadd.f32 %v240, 1.0
        %v369 = vadd.f32 %v241, 1.0
        %v370 = vadd.f32 %v242, 1.0
        %v371 = vadd.f32 %v243, 1.0
        %v372 = vadd.f32 %v244, 1.0
        %v373 = vadd.f32 %v245, 1.0
        %v374 = vadd.f32 %v246, 1.0
        %v375 = vadd.f32 %v247, 1.0
        %v376 = vadd.f32 %v248, 1.0
        %v377 = vadd.f32 %v249, 1.0
        %v378 = vadd.f32 %v250, 1.0
        %v379 = vadd.f32 %v251, 1.0
        %v380 = vadd.f32 %v252, 1.0
        %v381 = vadd.f32 %v253, 1.0
        %v382 = vadd.f32 %v254, 1.0
        %v383 = vadd.f32 %v255, 1.0
        %v384 = vadd.f32 %v256, 1.0
        %v385 = vadd.f32 %v257, 1.0
        %v386 = vadd.f32 %v258, 1.0
        %v387 = vadd.f32 %v259, 1.0
        %v388 = vadd.f32 %v260, 1.0
        %v389 = vadd.f32 %v261, 1.0
        %v390 = vadd.f32 %v262, 1.0
        %v391 = vadd.f32 %v263, 1.0
        %v392 = vadd.f32 %v264, 1.0
        %393 = vst [vmem:[%s134] sm:$0xff] %v265
        %394 = vst [vmem:[%s134 + $0x8] sm:$0xff] %v266
        %395 = vst [vmem:[%s134 + $0x10] sm:$0xff] %v267
        %396 = vst [vmem:[%s134 + $0x18] sm:$0xff] %v268
        %397 = vst [vmem:[%s134 + $0x20] sm:$0xff] %v269
        %398 = vst [vmem:[%s134 + $0x28] sm:$0xff] %v270
        %399 = vst [vmem:[%s134 + $0x30] sm:$0xff] %v271
        %400 = vst [vmem:[%s134 + $0x38] sm:$0xff] %v272
        %401 = vst [vmem:[%s134 + $0x40] sm:$0xff] %v273
        %402 = vst [vmem:[%s134 + $0x48] sm:$0xff] %v274
        %403 = vst [vmem:[%s134 + $0x50] sm:$0xff] %v275
        %404 = vst [vmem:[%s134 + $0x58] sm:$0xff] %v276
        %405 = vst [vmem:[%s134 + $0x60] sm:$0xff] %v277
        %406 = vst [vmem:[%s134 + $0x68] sm:$0xff] %v278
        %407 = vst [vmem:[%s134 + $0x70] sm:$0xff] %v279
        %408 = vst [vmem:[%s134 + $0x78] sm:$0xff] %v280
        %409 = vst [vmem:[%s134 + $0x80] sm:$0xff] %v281
        %410 = vst [vmem:[%s134 + $0x88] sm:$0xff] %v282
        %411 = vst [vmem:[%s134 + $0x90] sm:$0xff] %v283
        %412 = vst [vmem:[%s134 + $0x98] sm:$0xff] %v284
        %413 = vst [vmem:[%s134 + $0xa0] sm:$0xff] %v285
        %414 = vst [vmem:[%s134 + $0xa8] sm:$0xff] %v286
        %415 = vst [vmem:[%s134 + $0xb0] sm:$0xff] %v287
        %416 = vst [vmem:[%s134 + $0xb8] sm:$0xff] %v288
        %417 = vst [vmem:[%s134 + $0xc0] sm:$0xff] %v289
        %418 = vst [vmem:[%s134 + $0xc8] sm:$0xff] %v290
        %419 = vst [vmem:[%s134 + $0xd0] sm:$0xff] %v291
        %420 = vst [vmem:[%s134 + $0xd8] sm:$0xff] %v292
        %421 = vst [vmem:[%s134 + $0xe0] sm:$0xff] %v293
        %422 = vst [vmem:[%s134 + $0xe8] sm:$0xff] %v294
        %423 = vst [vmem:[%s134 + $0xf0] sm:$0xff] %v295
        %424 = vst [vmem:[%s134 + $0xf8] sm:$0xff] %v296
        %425 = vst [vmem:[%s134 + $0x100] sm:$0xff] %v297
        %426 = vst [vmem:[%s134 + $0x108] sm:$0xff] %v298
        %427 = vst [vmem:[%s134 + $0x110] sm:$0xff] %v299
        %428 = vst [vmem:[%s134 + $0x118] sm:$0xff] %v300
        %429 = vst [vmem:[%s134 + $0x120] sm:$0xff] %v301
        %430 = vst [vmem:[%s134 + $0x128] sm:$0xff] %v302
        %431 = vst [vmem:[%s134 + $0x130] sm:$0xff] %v303
        %432 = vst [vmem:[%s134 + $0x138] sm:$0xff] %v304
        %433 = vst [vmem:[%s134 + $0x140] sm:$0xff] %v305
        %434 = vst [vmem:[%s134 + $0x148] sm:$0xff] %v306
        %435 = vst [vmem:[%s134 + $0x150] sm:$0xff] %v307
        %436 = vst [vmem:[%s134 + $0x158] sm:$0xff] %v308
        %437 = vst [vmem:[%s134 + $0x160] sm:$0xff] %v309
        %438 = vst [vmem:[%s134 + $0x168] sm:$0xff] %v310
        %439 = vst [vmem:[%s134 + $0x170] sm:$0xff] %v311
        %440 = vst [vmem:[%s134 + $0x178] sm:$0xff] %v312
        %441 = vst [vmem:[%s134 + $0x180] sm:$0xff] %v313
        %442 = vst [vmem:[%s134 + $0x188] sm:$0xff] %v314
        %443 = vst [vmem:[%s134 + $0x190] sm:$0xff] %v315
        %444 = vst [vmem:[%s134 + $0x198] sm:$0xff] %v316
        %445 = vst [vmem:[%s134 + $0x1a0] sm:$0xff] %v317
        %446 = vst [vmem:[%s134 + $0x1a8] sm:$0xff] %v318
        %447 = vst [vmem:[%s134 + $0x1b0] sm:$0xff] %v319
        %448 = vst [vmem:[%s134 + $0x1b8] sm:$0xff] %v320
        %449 = vst [vmem:[%s134 + $0x1c0] sm:$0xff] %v321
        %450 = vst [vmem:[%s134 + $0x1c8] sm:$0xff] %v322
        %451 = vst [vmem:[%s134 + $0x1d0] sm:$0xff] %v323
        %452 = vst [vmem:[%s134 + $0x1d8] sm:$0xff] %v324
        %453 = vst [vmem:[%s134 + $0x1e0] sm:$0xff] %v325
        %454 = vst [vmem:[%s134 + $0x1e8] sm:$0xff] %v326
        %455 = vst [vmem:[%s134 + $0x1f0] sm:$0xff] %v327
        %456 = vst [vmem:[%s134 + $0x1f8] sm:$0xff] %v328
        %457 = vst [vmem:[%s134 + $0x200] sm:$0xff] %v329
        %458 = vst [vmem:[%s134 + $0x208] sm:$0xff] %v330
        %459 = vst [vmem:[%s134 + $0x210] sm:$0xff] %v331
        %460 = vst [vmem:[%s134 + $0x218] sm:$0xff] %v332
        %461 = vst [vmem:[%s134 + $0x220] sm:$0xff] %v333
        %462 = vst [vmem:[%s134 + $0x228] sm:$0xff] %v334
        %463 = vst [vmem:[%s134 + $0x230] sm:$0xff] %v335
        %464 = vst [vmem:[%s134 + $0x238] sm:$0xff] %v336
        %465 = vst [vmem:[%s134 + $0x240] sm:$0xff] %v337
        %466 = vst [vmem:[%s134 + $0x248] sm:$0xff] %v338
        %467 = vst [vmem:[%s134 + $0x250] sm:$0xff] %v339
        %468 = vst [vmem:[%s134 + $0x258] sm:$0xff] %v340
        %469 = vst [vmem:[%s134 + $0x260] sm:$0xff] %v341
        %470 = vst [vmem:[%s134 + $0x268] sm:$0xff] %v342
        %471 = vst [vmem:[%s134 + $0x270] sm:$0xff] %v343
        %472 = vst [vmem:[%s134 + $0x278] sm:$0xff] %v344
        %473 = vst [vmem:[%s134 + $0x280] sm:$0xff] %v345
        %474 = vst [vmem:[%s134 + $0x288] sm:$0xff] %v346
        %475 = vst [vmem:[%s134 + $0x290] sm:$0xff] %v347
        %476 = vst [vmem:[%s134 + $0x298] sm:$0xff] %v348
        %477 = vst [vmem:[%s134 + $0x2a0] sm:$0xff] %v349
        %478 = vst [vmem:[%s134 + $0x2a8] sm:$0xff] %v350
        %479 = vst [vmem:[%s134 + $0x2b0] sm:$0xff] %v351
        %480 = vst [vmem:[%s134 + $0x2b8] sm:$0xff] %v352
        %481 = vst [vmem:[%s134 + $0x2c0] sm:$0xff] %v353
        %482 = vst [vmem:[%s134 + $0x2c8] sm:$0xff] %v354
        %483 = vst [vmem:[%s134 + $0x2d0] sm:$0xff] %v355
        %484 = vst [vmem:[%s134 + $0x2d8] sm:$0xff] %v356
        %485 = vst [vmem:[%s134 + $0x2e0] sm:$0xff] %v357
        %486 = vst [vmem:[%s134 + $0x2e8] sm:$0xff] %v358
        %487 = vst [vmem:[%s134 + $0x2f0] sm:$0xff] %v359
        %488 = vst [vmem:[%s134 + $0x2f8] sm:$0xff] %v360
        %489 = vst [vmem:[%s134 + $0x300] sm:$0xff] %v361
        %490 = vst [vmem:[%s134 + $0x308] sm:$0xff] %v362
        %491 = vst [vmem:[%s134 + $0x310] sm:$0xff] %v363
        %492 = vst [vmem:[%s134 + $0x318] sm:$0xff] %v364
        %493 = vst [vmem:[%s134 + $0x320] sm:$0xff] %v365
        %494 = vst [vmem:[%s134 + $0x328] sm:$0xff] %v366
        %495 = vst [vmem:[%s134 + $0x330] sm:$0xff] %v367
        %496 = vst [vmem:[%s134 + $0x338] sm:$0xff] %v368
        %497 = vst [vmem:[%s134 + $0x340] sm:$0xff] %v369
        %498 = vst [vmem:[%s134 + $0x348] sm:$0xff] %v370
        %499 = vst [vmem:[%s134 + $0x350] sm:$0xff] %v371
        %500 = vst [vmem:[%s134 + $0x358] sm:$0xff] %v372
        %501 = vst [vmem:[%s134 + $0x360] sm:$0xff] %v373
        %502 = vst [vmem:[%s134 + $0x368] sm:$0xff] %v374
        %503 = vst [vmem:[%s134 + $0x370] sm:$0xff] %v375
        %504 = vst [vmem:[%s134 + $0x378] sm:$0xff] %v376
        %505 = vst [vmem:[%s134 + $0x380] sm:$0xff] %v377
        %506 = vst [vmem:[%s134 + $0x388] sm:$0xff] %v378
        %507 = vst [vmem:[%s134 + $0x390] sm:$0xff] %v379
        %508 = vst [vmem:[%s134 + $0x398] sm:$0xff] %v380
        %509 = vst [vmem:[%s134 + $0x3a0] sm:$0xff] %v381
        %510 = vst [vmem:[%s134 + $0x3a8] sm:$0xff] %v382
        %511 = vst [vmem:[%s134 + $0x3b0] sm:$0xff] %v383
        %512 = vst [vmem:[%s134 + $0x3b8] sm:$0xff] %v384
        %513 = vst [vmem:[%s134 + $0x3c0] sm:$0xff] %v385
        %514 = vst [vmem:[%s134 + $0x3c8] sm:$0xff] %v386
        %515 = vst [vmem:[%s134 + $0x3d0] sm:$0xff] %v387
        %516 = vst [vmem:[%s134 + $0x3d8] sm:$0xff] %v388
        %517 = vst [vmem:[%s134 + $0x3e0] sm:$0xff] %v389
        %518 = vst [vmem:[%s134 + $0x3e8] sm:$0xff] %v390
        %519 = vst [vmem:[%s134 + $0x3f0] sm:$0xff] %v391
        %520 = vst [vmem:[%s134 + $0x3f8] sm:$0xff] %v392
        %s521 = sand.u32 %s52, 1
        %s522 = scalar_lea.sflag [#allocation4], %s521
        %s523 = sand.u32 %s52, 1
        %s524 = smul.addr %s523, 1024
        %s525 = scalar_lea.vmem [#allocation5], %s524
        // Predicated region
        $region29: #{tpu_custom_call.1} parent=23 // pred_check
          %p526 = pneg %p62
        $region30: #{tpu_custom_call.1} parent=23 // pred_check_branch
          %528 = sbr.rel (%p526) target = $region32
        $region31: #{tpu_custom_call.1} parent=23 // pred_region
          %s529 = smul.u32 128, %s18
          %s531 = ssub.s32 16384, 16384
          %532 = vsyncadd %s522, %s531
          %s533 = smul.addr %s529, 128
          %s534 = scalar_lea.hbm %s1, %s533
          %s535 = sshll.u32 %s525, 4
          %s536 = int_to_ptr.vmem [resolvable:$true] %s535
          %541 = dma.vmem_to_hbm [thread:$0]  %s536, 16384, %s534, %s522, 128, 128, 8
        $region32: #{tpu_custom_call.1} parent=23 // pred_fallthru
          _
      $region24: #{tpu_custom_call.1} parent=5 // pred_fallthru
        _
      %p542 = scmp.le.s32.totalorder 2, %s13
      // Predicated region
      $region33: #{tpu_custom_call.1} parent=5 // pred_check
        %p543 = pneg %p542
      $region34: #{tpu_custom_call.1} parent=5 // pred_check_branch
        %545 = sbr.rel (%p543) target = $region36
      $region35: #{tpu_custom_call.1} parent=5 // pred_region
        %s546 = ssub.s32 %s13, 2
        // Predicated region
        $region37: #{tpu_custom_call.1} parent=35 // pred_check
          %p547 = pneg %p68
        $region38: #{tpu_custom_call.1} parent=35 // pred_check_branch
          %549 = sbr.rel (%p547) target = $region40
        $region39: #{tpu_custom_call.1} parent=35 // pred_region
          %s550 = sand.u32 %s53, 1
          %s551 = scalar_lea.sflag [#allocation4], %s550
          %s552 = sand.u32 %s53, 1
          %s553 = smul.addr %s552, 1024
          %s554 = scalar_lea.vmem [#allocation5], %s553
          %555 = dma.done %s551, 16384
        $region40: #{tpu_custom_call.1} parent=35 // pred_fallthru
          _
      $region36: #{tpu_custom_call.1} parent=5 // pred_fallthru
        _
    $region6: #{tpu_custom_call.1} parent=1 // loop_footer
      %s17 = sadd.s32 1, %s13
    $region7: #{tpu_custom_call.1} parent=1 // loop_footer_branch
      %12 = sbr.rel target = $region3
    $region8: #{tpu_custom_call.1} parent=1 // loop_exit
      _
    %556 = vsyncpa [#allocation3], 1
    %s557 = scalar_lea.sflag [#allocation3], 1
    %558 = vsyncpa %s557, 1
    %559 = vsyncpa [#allocation4], 1
    %s560 = scalar_lea.sflag [#allocation4], 1
    %561 = vsyncpa %s560, 1

</llo_original>
